<compile_context>
chip_gen: v5e
topology: v5e:2x2
jax: 0.10.0
libtpu: 0.0.40
codegen_flags: <defaults>
</compile_context>

<pallas_src>
import functools

import jax
import jax.numpy as jnp
from jax import lax
from jax.experimental import pallas as pl
from jax.experimental.pallas import tpu as pltpu


def _triplane_kernel(coords_ref, planes_ref, out_ref, *, res):
    """One tile of TM points.

    coords_ref : (3, TM)      point coords (x, y, z rows) in [-1, 1], points on lanes
    planes_ref : (C, 3*R*R)   channel-major flattened planes, k = plane*R*R + y*R + x
    out_ref    : (C, TM)      summed features (channels on sublanes, points on lanes)
    """
    R = res
    C, TM = out_ref.shape

    c0 = coords_ref[0:1, :]          # (1, TM)
    c1 = coords_ref[1:2, :]
    c2 = coords_ref[2:3, :]
    # grid_sample x (W index) / y (H index) per plane: xy=(c0,c1), yz=(c1,c2), xz=(c0,c2)
    gx = jnp.concatenate([c0, c1, c0], axis=0)        # (3, TM)
    gy = jnp.concatenate([c1, c2, c2], axis=0)        # (3, TM)

    # align_corners=True pixel coordinates; zeros-padding validity is folded into the
    # corner weights while they are still (3, TM).
    hi = float(R - 1)
    ix = (gx + 1.0) * (0.5 * (R - 1))
    iy = (gy + 1.0) * (0.5 * (R - 1))
    x0 = jnp.floor(ix)
    y0 = jnp.floor(iy)
    x1 = x0 + 1.0
    y1 = y0 + 1.0
    fx = ix - x0
    fy = iy - y0
    wx0 = jnp.where((x0 >= 0.0) & (x0 <= hi), 1.0 - fx, 0.0)
    wx1 = jnp.where((x1 >= 0.0) & (x1 <= hi), fx, 0.0)
    wy0 = jnp.where((y0 >= 0.0) & (y0 <= hi), 1.0 - fy, 0.0)
    wy1 = jnp.where((y1 >= 0.0) & (y1 <= hi), fy, 0.0)

    # Per-axis one-hot weight vectors, lane-dense: (3, R, TM).  All indices are exact
    # small integers in f32, so the equality compares are exact.
    ridx = lax.broadcasted_iota(jnp.int32, (1, R, 1), 1).astype(jnp.float32)
    wx_oh = (jnp.where(ridx == x0[:, None, :], wx0[:, None, :], 0.0)
             + jnp.where(ridx == x1[:, None, :], wx1[:, None, :], 0.0))
    wy_oh = (jnp.where(ridx == y0[:, None, :], wy0[:, None, :], 0.0)
             + jnp.where(ridx == y1[:, None, :], wy1[:, None, :], 0.0))

    # Bilinear weight matrix for all three planes, transposed: w[k, p], k = plane*R*R + y*R + x.
    w = (wy_oh[:, :, None, :] * wx_oh[:, None, :, :]).reshape(3 * R * R, TM)

    # Single fused MXU contraction over K = 3*R*R; output stays lane-dense (C, TM).
    out_ref[...] = jnp.dot(planes_ref[...], w, preferred_element_type=jnp.float32)


def _choose_point_tile(M, R, C):
    """Largest point tile (multiple of 128 for lane-dense stores) that keeps >= 2 grid
    steps when M allows it (v7x megacore) and keeps the resident planes plus the dense
    weight temporary comfortably inside VMEM."""
    planes_bytes = 2 * 3 * R * R * C * 4                    # resident planes, double-buffered
    budget = 24 << 20                                       # headroom under 32 MiB scoped limit
    best = 128
    for tm in (128, 256, 512, 1024):
        temp_bytes = 4 * tm * (3 * R * R + 6 * R + 4 * C + 16)   # weights + one-hots + io tiles
        if planes_bytes + temp_bytes > budget:
            break
        if tm == 128 or pl.cdiv(M, tm) >= 2:
            best = tm
    return best


def multi_triplane_forward(embeddings, obj_idx, coordinates, *, resolution, feature_dim):
    """embeddings: (3*num_objs, 1, C, R, R) float32 (PyTorch NCHW parameter layout).
    coordinates: (N, M, 3) float32, N must be 1 (grid_sample requires grid batch == plane batch).
    Returns features (N, M, C) = xy + yz + xz plane samples (bilinear, zeros pad, align_corners)."""
    N, M, _ = coordinates.shape
    assert N == 1, "PyTorch grid_sample requires plane batch (=1) == coordinate batch"
    R, C = resolution, feature_dim

    # This object's 3 planes, NCHW -> channel-major (C, 3*R*R); k = plane*R*R + y*R + x.
    planes = embeddings[3 * obj_idx:3 * obj_idx + 3, 0]             # (3, C, R, R)
    planes_ck = jnp.transpose(planes, (1, 0, 2, 3)).reshape(C, 3 * R * R)

    # Coordinates transposed so points sit on lanes; padded points are out of range (2.0),
    # so they bilinearly sample to exactly 0 and are sliced off at the end.
    TM = _choose_point_tile(M, R, C)
    Mp = pl.cdiv(M, TM) * TM
    coords_t = coordinates[0].T                                     # (3, M)
    if Mp != M:
        coords_t = jnp.pad(coords_t, ((0, 0), (0, Mp - M)), constant_values=2.0)

    vmem_est = 2 * 3 * R * R * C * 4 + 4 * TM * (3 * R * R + 6 * R + 4 * C + 16)
    vmem_limit = max(32 << 20, min(2 * vmem_est, 100 << 20))

    kernel = functools.partial(_triplane_kernel, res=R)
    out_t = pl.pallas_call(
        kernel,
        out_shape=jax.ShapeDtypeStruct((C, Mp), jnp.float32),
        grid_spec=pltpu.PrefetchScalarGridSpec(
            num_scalar_prefetch=0,
            grid=(Mp // TM,),
            in_specs=[
                pl.BlockSpec((3, TM), lambda i: (0, i)),            # per-tile coords
                pl.BlockSpec((C, 3 * R * R), lambda i: (0, 0)),     # resident planes
            ],
            out_specs=pl.BlockSpec((C, TM), lambda i: (0, i)),
        ),
        compiler_params=pltpu.CompilerParams(
            dimension_semantics=("parallel",),
            vmem_limit_bytes=vmem_limit,
        ),
    )(coords_t, planes_ck)

    return out_t[:, :M].T[None]                                     # (1, M, C)


# ---------------- pure-JAX reference (grid_sample bilinear, align_corners=True, zeros pad) ----
def _ref_sample_plane(plane_chw, coords2d, R):
    ix = (coords2d[:, 0] + 1.0) * 0.5 * (R - 1)
    iy = (coords2d[:, 1] + 1.0) * 0.5 * (R - 1)
    x0 = jnp.floor(ix); x1 = x0 + 1.0
    y0 = jnp.floor(iy); y1 = y0 + 1.0
    wx1 = ix - x0; wx0 = 1.0 - wx1
    wy1 = iy - y0; wy0 = 1.0 - wy1

    def gather(yi, xi):
        valid = (xi >= 0) & (xi <= R - 1) & (yi >= 0) & (yi <= R - 1)
        xc = jnp.clip(xi, 0, R - 1).astype(jnp.int32)
        yc = jnp.clip(yi, 0, R - 1).astype(jnp.int32)
        vals = plane_chw[:, yc, xc]  # (C, M)
        return jnp.where(valid[None, :], vals, 0.0)

    out = (gather(y0, x0) * (wy0 * wx0)[None]
           + gather(y0, x1) * (wy0 * wx1)[None]
           + gather(y1, x0) * (wy1 * wx0)[None]
           + gather(y1, x1) * (wy1 * wx1)[None])
    return out.T  # (M, C)


def _ref_forward(embeddings, obj_idx, coordinates, R):
    c = coordinates[0]
    xy = _ref_sample_plane(embeddings[3 * obj_idx + 0, 0], c[:, (0, 1)], R)
    yz = _ref_sample_plane(embeddings[3 * obj_idx + 1, 0], c[:, (1, 2)], R)
    xz = _ref_sample_plane(embeddings[3 * obj_idx + 2, 0], c[:, (0, 2)], R)
    return (xy + yz + xz)[None]


if __name__ == "__main__":
    resolution, feature_dim, num_objs = 16, 32, 2
    key = jax.random.PRNGKey(0)
    k_emb, k_coord = jax.random.split(key)

    # nn.Parameter(torch.randn(1, C, R, R) * 0.001) for 3*num_objs planes (deterministic init)
    embeddings = (jax.random.normal(
        k_emb, (3 * num_objs, 1, feature_dim, resolution, resolution), jnp.float32) * 0.001)

    M = 100
    coordinates = jax.random.uniform(k_coord, (1, M, 3), jnp.float32, minval=-1.0, maxval=1.0)
    obj_idx = 1

    out = multi_triplane_forward(embeddings, obj_idx, coordinates,
                                 resolution=resolution, feature_dim=feature_dim)
    out = jax.block_until_ready(out)

    ref = _ref_forward(embeddings, obj_idx, coordinates, resolution)
    assert out.shape == (1, M, feature_dim), out.shape
    assert jnp.allclose(out, ref, atol=1e-5, rtol=1e-5), float(jnp.max(jnp.abs(out - ref)))

    print("KERNEL_OK")
</pallas_src>

<mosaic_0001>
module attributes {stable_mosaic.version = 11 : i64} {
  func.func @_triplane_kernel(%arg0: i32, %arg1: memref<3x128xf32, #tpu.memory_space<vmem>>, %arg2: memref<32x768xf32, #tpu.memory_space<vmem>>, %arg3: memref<32x128xf32, #tpu.memory_space<vmem>>) attributes {dimension_semantics = [#tpu.dimension_semantics<parallel>], iteration_bounds = array<i64: 1>, scalar_prefetch = 0 : i64, scratch_operands = 0 : i64, tpu.core_type = #tpu.core_type<tc>, window_params = [{transform_indices = @transform_0, window_bounds = array<i64: 3, 128>}, {pipeline_mode = #tpu.pipeline_mode<synchronous>, transform_indices = @transform_1, window_bounds = array<i64: 32, 768>}, {transform_indices = @transform_2, window_bounds = array<i64: 32, 128>}]} {
    %c0 = arith.constant 0 : index
    %c0_0 = arith.constant 0 : index
    %0 = vector.load %arg1[%c0, %c0_0] : memref<3x128xf32, #tpu.memory_space<vmem>>, vector<1x128xf32>
    %c1 = arith.constant 1 : index
    %c0_1 = arith.constant 0 : index
    %1 = vector.load %arg1[%c1, %c0_1] : memref<3x128xf32, #tpu.memory_space<vmem>>, vector<1x128xf32>
    %c2 = arith.constant 2 : index
    %c0_2 = arith.constant 0 : index
    %2 = vector.load %arg1[%c2, %c0_2] : memref<3x128xf32, #tpu.memory_space<vmem>>, vector<1x128xf32>
    %3 = tpu.concatenate %0, %1, %0 in 0 : vector<1x128xf32>, vector<1x128xf32>, vector<1x128xf32> -> vector<3x128xf32>
    %4 = tpu.concatenate %1, %2, %2 in 0 : vector<1x128xf32>, vector<1x128xf32>, vector<1x128xf32> -> vector<3x128xf32>
    %cst = arith.constant 1.000000e+00 : f32
    %5 = vector.broadcast %cst : f32 to vector<3x128xf32>
    %6 = arith.addf %3, %5 : vector<3x128xf32>
    %cst_3 = arith.constant 7.500000e+00 : f32
    %7 = vector.broadcast %cst_3 : f32 to vector<3x128xf32>
    %8 = arith.mulf %6, %7 : vector<3x128xf32>
    %cst_4 = arith.constant 1.000000e+00 : f32
    %9 = vector.broadcast %cst_4 : f32 to vector<3x128xf32>
    %10 = arith.addf %4, %9 : vector<3x128xf32>
    %cst_5 = arith.constant 7.500000e+00 : f32
    %11 = vector.broadcast %cst_5 : f32 to vector<3x128xf32>
    %12 = arith.mulf %10, %11 : vector<3x128xf32>
    %13 = math.floor %8 : vector<3x128xf32>
    %14 = math.floor %12 : vector<3x128xf32>
    %cst_6 = arith.constant 1.000000e+00 : f32
    %15 = vector.broadcast %cst_6 : f32 to vector<3x128xf32>
    %16 = arith.addf %13, %15 : vector<3x128xf32>
    %cst_7 = arith.constant 1.000000e+00 : f32
    %17 = vector.broadcast %cst_7 : f32 to vector<3x128xf32>
    %18 = arith.addf %14, %17 : vector<3x128xf32>
    %19 = arith.subf %8, %13 : vector<3x128xf32>
    %20 = arith.subf %12, %14 : vector<3x128xf32>
    %cst_8 = arith.constant 0.000000e+00 : f32
    %21 = vector.broadcast %cst_8 : f32 to vector<3x128xf32>
    %22 = arith.cmpf oge, %13, %21 : vector<3x128xf32>
    %cst_9 = arith.constant 1.500000e+01 : f32
    %23 = vector.broadcast %cst_9 : f32 to vector<3x128xf32>
    %24 = arith.cmpf ole, %13, %23 : vector<3x128xf32>
    %25 = arith.andi %22, %24 : vector<3x128xi1>
    %cst_10 = arith.constant 1.000000e+00 : f32
    %26 = vector.broadcast %cst_10 : f32 to vector<3x128xf32>
    %27 = arith.subf %26, %19 : vector<3x128xf32>
    %cst_11 = arith.constant 0.000000e+00 : f32
    %28 = vector.broadcast %cst_11 : f32 to vector<3x128xf32>
    %29 = arith.select %25, %27, %28 : vector<3x128xi1>, vector<3x128xf32>
    %cst_12 = arith.constant 0.000000e+00 : f32
    %30 = vector.broadcast %cst_12 : f32 to vector<3x128xf32>
    %31 = arith.cmpf oge, %16, %30 : vector<3x128xf32>
    %cst_13 = arith.constant 1.500000e+01 : f32
    %32 = vector.broadcast %cst_13 : f32 to vector<3x128xf32>
    %33 = arith.cmpf ole, %16, %32 : vector<3x128xf32>
    %34 = arith.andi %31, %33 : vector<3x128xi1>
    %cst_14 = arith.constant 0.000000e+00 : f32
    %35 = vector.broadcast %cst_14 : f32 to vector<3x128xf32>
    %36 = arith.select %34, %19, %35 : vector<3x128xi1>, vector<3x128xf32>
    %cst_15 = arith.constant 0.000000e+00 : f32
    %37 = vector.broadcast %cst_15 : f32 to vector<3x128xf32>
    %38 = arith.cmpf oge, %14, %37 : vector<3x128xf32>
    %cst_16 = arith.constant 1.500000e+01 : f32
    %39 = vector.broadcast %cst_16 : f32 to vector<3x128xf32>
    %40 = arith.cmpf ole, %14, %39 : vector<3x128xf32>
    %41 = arith.andi %38, %40 : vector<3x128xi1>
    %cst_17 = arith.constant 1.000000e+00 : f32
    %42 = vector.broadcast %cst_17 : f32 to vector<3x128xf32>
    %43 = arith.subf %42, %20 : vector<3x128xf32>
    %cst_18 = arith.constant 0.000000e+00 : f32
    %44 = vector.broadcast %cst_18 : f32 to vector<3x128xf32>
    %45 = arith.select %41, %43, %44 : vector<3x128xi1>, vector<3x128xf32>
    %cst_19 = arith.constant 0.000000e+00 : f32
    %46 = vector.broadcast %cst_19 : f32 to vector<3x128xf32>
    %47 = arith.cmpf oge, %18, %46 : vector<3x128xf32>
    %cst_20 = arith.constant 1.500000e+01 : f32
    %48 = vector.broadcast %cst_20 : f32 to vector<3x128xf32>
    %49 = arith.cmpf ole, %18, %48 : vector<3x128xf32>
    %50 = arith.andi %47, %49 : vector<3x128xi1>
    %cst_21 = arith.constant 0.000000e+00 : f32
    %51 = vector.broadcast %cst_21 : f32 to vector<3x128xf32>
    %52 = arith.select %50, %20, %51 : vector<3x128xi1>, vector<3x128xf32>
    %53 = tpu.iota {dimensions = array<i32: 1>} : vector<1x16x1xi32>
    %54 = arith.sitofp %53 : vector<1x16x1xi32> to vector<1x16x1xf32>
    %55 = vector.shape_cast %13 : vector<3x128xf32> to vector<3x1x128xf32>
    %56 = vector.broadcast %54 : vector<1x16x1xf32> to vector<3x16x128xf32>
    %57 = vector.broadcast %55 : vector<3x1x128xf32> to vector<3x16x128xf32>
    %58 = arith.cmpf oeq, %56, %57 : vector<3x16x128xf32>
    %59 = vector.shape_cast %29 : vector<3x128xf32> to vector<3x1x128xf32>
    %cst_22 = arith.constant 0.000000e+00 : f32
    %60 = vector.shape_cast %59 : vector<3x1x128xf32> to vector<3x1x128xf32>
    %61 = vector.broadcast %60 : vector<3x1x128xf32> to vector<3x16x128xf32>
    %62 = vector.broadcast %cst_22 : f32 to vector<3x16x128xf32>
    %63 = arith.select %58, %61, %62 : vector<3x16x128xi1>, vector<3x16x128xf32>
    %64 = vector.shape_cast %16 : vector<3x128xf32> to vector<3x1x128xf32>
    %65 = vector.broadcast %54 : vector<1x16x1xf32> to vector<3x16x128xf32>
    %66 = vector.broadcast %64 : vector<3x1x128xf32> to vector<3x16x128xf32>
    %67 = arith.cmpf oeq, %65, %66 : vector<3x16x128xf32>
    %68 = vector.shape_cast %36 : vector<3x128xf32> to vector<3x1x128xf32>
    %cst_23 = arith.constant 0.000000e+00 : f32
    %69 = vector.shape_cast %68 : vector<3x1x128xf32> to vector<3x1x128xf32>
    %70 = vector.broadcast %69 : vector<3x1x128xf32> to vector<3x16x128xf32>
    %71 = vector.broadcast %cst_23 : f32 to vector<3x16x128xf32>
    %72 = arith.select %67, %70, %71 : vector<3x16x128xi1>, vector<3x16x128xf32>
    %73 = arith.addf %63, %72 : vector<3x16x128xf32>
    %74 = vector.shape_cast %14 : vector<3x128xf32> to vector<3x1x128xf32>
    %75 = vector.broadcast %54 : vector<1x16x1xf32> to vector<3x16x128xf32>
    %76 = vector.broadcast %74 : vector<3x1x128xf32> to vector<3x16x128xf32>
    %77 = arith.cmpf oeq, %75, %76 : vector<3x16x128xf32>
    %78 = vector.shape_cast %45 : vector<3x128xf32> to vector<3x1x128xf32>
    %cst_24 = arith.constant 0.000000e+00 : f32
    %79 = vector.shape_cast %78 : vector<3x1x128xf32> to vector<3x1x128xf32>
    %80 = vector.broadcast %79 : vector<3x1x128xf32> to vector<3x16x128xf32>
    %81 = vector.broadcast %cst_24 : f32 to vector<3x16x128xf32>
    %82 = arith.select %77, %80, %81 : vector<3x16x128xi1>, vector<3x16x128xf32>
    %83 = vector.shape_cast %18 : vector<3x128xf32> to vector<3x1x128xf32>
    %84 = vector.broadcast %54 : vector<1x16x1xf32> to vector<3x16x128xf32>
    %85 = vector.broadcast %83 : vector<3x1x128xf32> to vector<3x16x128xf32>
    %86 = arith.cmpf oeq, %84, %85 : vector<3x16x128xf32>
    %87 = vector.shape_cast %52 : vector<3x128xf32> to vector<3x1x128xf32>
    %cst_25 = arith.constant 0.000000e+00 : f32
    %88 = vector.shape_cast %87 : vector<3x1x128xf32> to vector<3x1x128xf32>
    %89 = vector.broadcast %88 : vector<3x1x128xf32> to vector<3x16x128xf32>
    %90 = vector.broadcast %cst_25 : f32 to vector<3x16x128xf32>
    %91 = arith.select %86, %89, %90 : vector<3x16x128xi1>, vector<3x16x128xf32>
    %92 = arith.addf %82, %91 : vector<3x16x128xf32>
    %93 = vector.shape_cast %92 : vector<3x16x128xf32> to vector<3x16x1x128xf32>
    %94 = vector.shape_cast %73 : vector<3x16x128xf32> to vector<3x1x16x128xf32>
    %95 = vector.broadcast %93 : vector<3x16x1x128xf32> to vector<3x16x16x128xf32>
    %96 = vector.broadcast %94 : vector<3x1x16x128xf32> to vector<3x16x16x128xf32>
    %97 = arith.mulf %95, %96 : vector<3x16x16x128xf32>
    %98 = vector.shape_cast %97 : vector<3x16x16x128xf32> to vector<768x128xf32>
    %c0_26 = arith.constant 0 : index
    %c0_27 = arith.constant 0 : index
    %99 = vector.load %arg2[%c0_26, %c0_27] : memref<32x768xf32, #tpu.memory_space<vmem>>, vector<32x768xf32>
    %cst_28 = arith.constant dense<0.000000e+00> : vector<32x128xf32>
    %100 = tpu.matmul %99, %98, %cst_28 {dimension_numbers = #tpu.dot_dimension_numbers<[1], [0], [0], [1], [0, 0, 1, 1], [], []>} : vector<32x768xf32>, vector<768x128xf32>, vector<32x128xf32> -> vector<32x128xf32>
    %c0_29 = arith.constant 0 : index
    %c0_30 = arith.constant 0 : index
    %101 = vector.load %arg3[%c0_29, %c0_30] : memref<32x128xf32, #tpu.memory_space<vmem>>, vector<32x128xf32>
    tpu.vector_store %arg3[%c0_29, %c0_30], %100 {strides = array<i32>} : memref<32x128xf32, #tpu.memory_space<vmem>>, vector<32x128xf32>,
    return
  }
  func.func @transform_0(%arg0: i32) -> (i32, i32) {
    %c0_i32 = arith.constant 0 : i32
    %c0_i32_0 = arith.constant 0 : i32
    return %c0_i32, %arg0 : i32, i32
  }
  func.func @transform_1(%arg0: i32) -> (i32, i32) {
    %c0_i32 = arith.constant 0 : i32
    %c0_i32_0 = arith.constant 0 : i32
    %c0_i32_1 = arith.constant 0 : i32
    return %c0_i32, %c0_i32_0 : i32, i32
  }
  func.func @transform_2(%arg0: i32) -> (i32, i32) {
    %c0_i32 = arith.constant 0 : i32
    %c0_i32_0 = arith.constant 0 : i32
    return %c0_i32, %arg0 : i32, i32
  }
}

</mosaic_0001>

<llo_original>
// kernel: tpu_custom_call.1
$region0: #{tpu_custom_call.1}
  #allocation0 [shape = 'u32[]', space=smem, size = 0x4, offset = 0x4, fixed_abs, tag = 'smem constant byte address 0x4 - core index']
  #allocation1 [shape = 'u32[72,128]{1,0:T(1,128)}', space=vmem, size = 0x9000, scoped, tag = 'internal scratch']
  %s0 = inlined_call_operand.hbm [shape: f32[3,128], index: 0, kind: input, shape index: {}]
  %s1 = inlined_call_operand.hbm [shape: f32[32,768], index: 1, kind: input, shape index: {}]
  %s2 = inlined_call_operand.hbm [shape: f32[32,128], index: 2, kind: output, shape index: {}]
  %s3 = sld [smem:[#allocation0]]
  $region26: #{tpu_custom_call.1} parent=0
    _
  %s5 = ssub.s32 1, %s3
  %s6 = scalar_select 0, %s5, %s3
  $region1: #{tpu_custom_call.1} parent=0
    #allocation2 [shape = 'u8[2048]{0}', space=vmem, size = 0x800, scoped, tag = 'input window, operand 0, single buffered']
    #allocation3 [shape = 's32[1]{0}', space=sflag, size = 0x4, scoped, tag = 'scoped memory for tpu_custom_call.1']
    #allocation4 [shape = 's32[1]{0}', space=sflag, size = 0x4, scoped, tag = 'scoped memory for tpu_custom_call.1']
    #allocation5 [shape = 'u8[98304]{0}', space=vmem, size = 0x18000, scoped, tag = 'input window, operand 1, single buffered']
    #allocation6 [shape = 's32[1]{0}', space=sflag, size = 0x4, scoped, tag = 'scoped memory for tpu_custom_call.1']
    #allocation7 [shape = 'u8[16384]{0}', space=vmem, size = 0x4000, scoped, tag = 'output window, operand 0, single buffered']
    %7 = vsyncpa [#allocation3], 0
    %8 = vsyncpa [#allocation6], 0
    %9 = vsyncpa [#allocation4], 0
    // Predicated region
    $region2: #{tpu_custom_call.1} parent=1 // pred_check
      _
    $region3: #{tpu_custom_call.1} parent=1 // pred_check_branch
      %11 = sbr.rel (0) target = $region5
    $region4: #{tpu_custom_call.1} parent=1 // pred_region
      %13 = vsyncadd [#allocation3], 0
      %s15 = sshll.u32 %s0, 4
      %s16 = int_to_ptr.hbm [resolvable:$true] %s15
      %s17 = sshll.u32 [#allocation2], 4
      %s18 = int_to_ptr.vmem [resolvable:$true] %s17
      %20 = dma.hbm_to_vmem [thread:$0]  %s16, 64, %s18, [#allocation3]
    $region5: #{tpu_custom_call.1} parent=1 // pred_fallthru
      _
    // Predicated region
    $region6: #{tpu_custom_call.1} parent=1 // pred_check
      _
    $region7: #{tpu_custom_call.1} parent=1 // pred_check_branch
      %22 = sbr.rel (0) target = $region9
    $region8: #{tpu_custom_call.1} parent=1 // pred_region
      %24 = vsyncadd [#allocation6], 0
      %s25 = sshll.u32 %s1, 4
      %s26 = int_to_ptr.hbm [resolvable:$true] %s25
      %s27 = sshll.u32 [#allocation5], 4
      %s28 = int_to_ptr.vmem [resolvable:$true] %s27
      %33 = dma.hbm_to_vmem [thread:$0]  %s26, 3072, %s28, [#allocation6], 768, 768, 48
    $region9: #{tpu_custom_call.1} parent=1 // pred_fallthru
      _
    // Predicated region
    $region10: #{tpu_custom_call.1} parent=1 // pred_check
      _
    $region11: #{tpu_custom_call.1} parent=1 // pred_check_branch
      %35 = sbr.rel (0) target = $region13
    $region12: #{tpu_custom_call.1} parent=1 // pred_region
      %37 = dma.done [#allocation3], 64
    $region13: #{tpu_custom_call.1} parent=1 // pred_fallthru
      _
    // Predicated region
    $region14: #{tpu_custom_call.1} parent=1 // pred_check
      _
    $region15: #{tpu_custom_call.1} parent=1 // pred_check_branch
      %39 = sbr.rel (0) target = $region17
    $region16: #{tpu_custom_call.1} parent=1 // pred_region
      %41 = dma.done [#allocation6], 3072
    $region17: #{tpu_custom_call.1} parent=1 // pred_fallthru
      _
    %v42 = vld [vmem:[#allocation2] sm:$0x1]
    %v43 = vld [vmem:[#allocation2 + $0x1] sm:$0x1]
    %v44 = vld [vmem:[#allocation2 + $0x2] sm:$0x1]
    %v46 = vrot.slane %v43, 7
    %v49 = vrot.slane %v42, 6
    %vm51 = vcmask 1040384
    %v52 = vsel %vm51, %v42, %v46
    %vm53 = vcmask 1041408
    %v54 = vsel %vm53, %v52, %v49
    %v56 = vrot.slane %v44, 7
    %v58 = vrot.slane %v44, 6
    %v60 = vsel %vm51, %v43, %v56
    %v61 = vsel %vm53, %v60, %v58
    %v62 = vadd.f32 %v54, 1.0
    %v63 = vmul.f32 %v62, 7.5
    %v64 = vadd.f32 %v61, 1.0
    %v65 = vmul.f32 %v64, 7.5
    %v66 = vfloor.f32 %v63
    %v67 = vfloor.f32 %v65
    %v68 = vadd.f32 %v66, 1.0
    %v69 = vadd.f32 %v67, 1.0
    %v70 = vsub.f32 %v63, %v66
    %v71 = vsub.f32 %v65, %v67
    %vm72 = vcmp.ge.f32.partialorder %v66, 0.0
    %vm73 = vcmp.le.f32.partialorder %v66, 15.0
    %vm74 = vmand %vm72, %vm73
    %v75 = vsub.f32 1.0, %v70
    %v76 = vsel %vm74, %v75, 0.0
    %vm77 = vcmp.ge.f32.partialorder %v68, 0.0
    %vm78 = vcmp.le.f32.partialorder %v68, 15.0
    %vm79 = vmand %vm77, %vm78
    %v80 = vsel %vm79, %v70, 0.0
    %vm81 = vcmp.ge.f32.partialorder %v67, 0.0
    %vm82 = vcmp.le.f32.partialorder %v67, 15.0
    %vm83 = vmand %vm81, %vm82
    %v84 = vsub.f32 1.0, %v71
    %v85 = vsel %vm83, %v84, 0.0
    %vm86 = vcmp.ge.f32.partialorder %v69, 0.0
    %vm87 = vcmp.le.f32.partialorder %v69, 15.0
    %vm88 = vmand %vm86, %vm87
    %v89 = vsel %vm88, %v71, 0.0
    %v90 = vlaneseq
    %v91 = vshrl.u32 %v90, 7
    %v92 = vadd.s32 %v91, 8
    %v93 = vcvt.s32.f32 %v91
    %v94 = vcvt.s32.f32 %v92
    %v96 = vrot.slane %v66, 1
    %v97 = vrot.slane %v66, 2
    %v98 = vperm.slane %v66, 0
    %v99 = vperm.slane %v96, 0
    %v100 = vperm.slane %v97, 0
    %vm104 = vcmp.eq.f32.partialorder %v93, %v98
    %vm105 = vcmp.eq.f32.partialorder %v94, %v98
    %vm106 = vcmp.eq.f32.partialorder %v93, %v99
    %vm107 = vcmp.eq.f32.partialorder %v94, %v99
    %vm108 = vcmp.eq.f32.partialorder %v93, %v100
    %vm109 = vcmp.eq.f32.partialorder %v94, %v100
    %v111 = vrot.slane %v76, 1
    %v112 = vrot.slane %v76, 2
    %v113 = vperm.slane %v76, 0
    %v114 = vperm.slane %v111, 0
    %v115 = vperm.slane %v112, 0
    %v119 = vsel %vm104, %v113, 0.0
    %v120 = vsel %vm105, %v113, 0.0
    %v121 = vsel %vm106, %v114, 0.0
    %v122 = vsel %vm107, %v114, 0.0
    %v123 = vsel %vm108, %v115, 0.0
    %v124 = vsel %vm109, %v115, 0.0
    %v126 = vrot.slane %v68, 1
    %v127 = vrot.slane %v68, 2
    %v128 = vperm.slane %v68, 0
    %v129 = vperm.slane %v126, 0
    %v130 = vperm.slane %v127, 0
    %vm134 = vcmp.eq.f32.partialorder %v93, %v128
    %vm135 = vcmp.eq.f32.partialorder %v94, %v128
    %vm136 = vcmp.eq.f32.partialorder %v93, %v129
    %vm137 = vcmp.eq.f32.partialorder %v94, %v129
    %vm138 = vcmp.eq.f32.partialorder %v93, %v130
    %vm139 = vcmp.eq.f32.partialorder %v94, %v130
    %v141 = vrot.slane %v80, 1
    %v142 = vrot.slane %v80, 2
    %v143 = vperm.slane %v80, 0
    %v144 = vperm.slane %v141, 0
    %v145 = vperm.slane %v142, 0
    %v149 = vsel %vm134, %v143, 0.0
    %v150 = vsel %vm135, %v143, 0.0
    %v151 = vsel %vm136, %v144, 0.0
    %v152 = vsel %vm137, %v144, 0.0
    %v153 = vsel %vm138, %v145, 0.0
    %v154 = vsel %vm139, %v145, 0.0
    %v155 = vadd.f32 %v119, %v149
    %v156 = vadd.f32 %v120, %v150
    %v157 = vadd.f32 %v121, %v151
    %v158 = vadd.f32 %v122, %v152
    %v159 = vadd.f32 %v123, %v153
    %v160 = vadd.f32 %v124, %v154
    %v162 = vrot.slane %v67, 1
    %v163 = vrot.slane %v67, 2
    %v164 = vperm.slane %v67, 0
    %v165 = vperm.slane %v162, 0
    %v166 = vperm.slane %v163, 0
    %vm170 = vcmp.eq.f32.partialorder %v93, %v164
    %vm171 = vcmp.eq.f32.partialorder %v94, %v164
    %vm172 = vcmp.eq.f32.partialorder %v93, %v165
    %vm173 = vcmp.eq.f32.partialorder %v94, %v165
    %vm174 = vcmp.eq.f32.partialorder %v93, %v166
    %vm175 = vcmp.eq.f32.partialorder %v94, %v166
    %v177 = vrot.slane %v85, 1
    %v178 = vrot.slane %v85, 2
    %v179 = vperm.slane %v85, 0
    %v180 = vperm.slane %v177, 0
    %v181 = vperm.slane %v178, 0
    %v185 = vsel %vm170, %v179, 0.0
    %v186 = vsel %vm171, %v179, 0.0
    %v187 = vsel %vm172, %v180, 0.0
    %v188 = vsel %vm173, %v180, 0.0
    %v189 = vsel %vm174, %v181, 0.0
    %v190 = vsel %vm175, %v181, 0.0
    %v192 = vrot.slane %v69, 1
    %v193 = vrot.slane %v69, 2
    %v194 = vperm.slane %v69, 0
    %v195 = vperm.slane %v192, 0
    %v196 = vperm.slane %v193, 0
    %vm200 = vcmp.eq.f32.partialorder %v93, %v194
    %vm201 = vcmp.eq.f32.partialorder %v94, %v194
    %vm202 = vcmp.eq.f32.partialorder %v93, %v195
    %vm203 = vcmp.eq.f32.partialorder %v94, %v195
    %vm204 = vcmp.eq.f32.partialorder %v93, %v196
    %vm205 = vcmp.eq.f32.partialorder %v94, %v196
    %v207 = vrot.slane %v89, 1
    %v208 = vrot.slane %v89, 2
    %v209 = vperm.slane %v89, 0
    %v210 = vperm.slane %v207, 0
    %v211 = vperm.slane %v208, 0
    %v215 = vsel %vm200, %v209, 0.0
    %v216 = vsel %vm201, %v209, 0.0
    %v217 = vsel %vm202, %v210, 0.0
    %v218 = vsel %vm203, %v210, 0.0
    %v219 = vsel %vm204, %v211, 0.0
    %v220 = vsel %vm205, %v211, 0.0
    %v221 = vadd.f32 %v185, %v215
    %v222 = vadd.f32 %v186, %v216
    %v223 = vadd.f32 %v187, %v217
    %v224 = vadd.f32 %v188, %v218
    %v225 = vadd.f32 %v189, %v219
    %v226 = vadd.f32 %v190, %v220
    %v233 = vrot.slane %v221, 1
    %v234 = vrot.slane %v221, 2
    %v235 = vrot.slane %v221, 3
    %v236 = vrot.slane %v221, 4
    %v237 = vrot.slane %v221, 5
    %v238 = vrot.slane %v221, 6
    %v239 = vrot.slane %v221, 7
    %v240 = vrot.slane %v222, 1
    %v241 = vrot.slane %v222, 2
    %v242 = vrot.slane %v222, 3
    %v243 = vrot.slane %v222, 4
    %v244 = vrot.slane %v222, 5
    %v245 = vrot.slane %v222, 6
    %v246 = vrot.slane %v222, 7
    %v247 = vrot.slane %v223, 1
    %v248 = vrot.slane %v223, 2
    %v249 = vrot.slane %v223, 3
    %v250 = vrot.slane %v223, 4
    %v251 = vrot.slane %v223, 5
    %v252 = vrot.slane %v223, 6
    %v253 = vrot.slane %v223, 7
    %v254 = vrot.slane %v224, 1
    %v255 = vrot.slane %v224, 2
    %v256 = vrot.slane %v224, 3
    %v257 = vrot.slane %v224, 4
    %v258 = vrot.slane %v224, 5
    %v259 = vrot.slane %v224, 6
    %v260 = vrot.slane %v224, 7
    %v261 = vrot.slane %v225, 1
    %v262 = vrot.slane %v225, 2
    %v263 = vrot.slane %v225, 3
    %v264 = vrot.slane %v225, 4
    %v265 = vrot.slane %v225, 5
    %v266 = vrot.slane %v225, 6
    %v267 = vrot.slane %v225, 7
    %v268 = vrot.slane %v226, 1
    %v269 = vrot.slane %v226, 2
    %v270 = vrot.slane %v226, 3
    %v271 = vrot.slane %v226, 4
    %v272 = vrot.slane %v226, 5
    %v273 = vrot.slane %v226, 6
    %v274 = vrot.slane %v226, 7
    %v275 = vperm.slane %v221, 0
    %v276 = vperm.slane %v233, 0
    %v277 = vperm.slane %v234, 0
    %v278 = vperm.slane %v235, 0
    %v279 = vperm.slane %v236, 0
    %v280 = vperm.slane %v237, 0
    %v281 = vperm.slane %v238, 0
    %v282 = vperm.slane %v239, 0
    %v283 = vperm.slane %v222, 0
    %v284 = vperm.slane %v240, 0
    %v285 = vperm.slane %v241, 0
    %v286 = vperm.slane %v242, 0
    %v287 = vperm.slane %v243, 0
    %v288 = vperm.slane %v244, 0
    %v289 = vperm.slane %v245, 0
    %v290 = vperm.slane %v246, 0
    %v291 = vperm.slane %v223, 0
    %v292 = vperm.slane %v247, 0
    %v293 = vperm.slane %v248, 0
    %v294 = vperm.slane %v249, 0
    %v295 = vperm.slane %v250, 0
    %v296 = vperm.slane %v251, 0
    %v297 = vperm.slane %v252, 0
    %v298 = vperm.slane %v253, 0
    %v299 = vperm.slane %v224, 0
    %v300 = vperm.slane %v254, 0
    %v301 = vperm.slane %v255, 0
    %v302 = vperm.slane %v256, 0
    %v303 = vperm.slane %v257, 0
    %v304 = vperm.slane %v258, 0
    %v305 = vperm.slane %v259, 0
    %v306 = vperm.slane %v260, 0
    %v307 = vperm.slane %v225, 0
    %v308 = vperm.slane %v261, 0
    %v309 = vperm.slane %v262, 0
    %v310 = vperm.slane %v263, 0
    %v311 = vperm.slane %v264, 0
    %v312 = vperm.slane %v265, 0
    %v313 = vperm.slane %v266, 0
    %v314 = vperm.slane %v267, 0
    %v315 = vperm.slane %v226, 0
    %v316 = vperm.slane %v268, 0
    %v317 = vperm.slane %v269, 0
    %v318 = vperm.slane %v270, 0
    %v319 = vperm.slane %v271, 0
    %v320 = vperm.slane %v272, 0
    %v321 = vperm.slane %v273, 0
    %v322 = vperm.slane %v274, 0
    %v371 = vmul.f32 %v275, %v155
    %v372 = vmul.f32 %v275, %v156
    %v373 = vmul.f32 %v276, %v155
    %v374 = vmul.f32 %v276, %v156
    %v375 = vmul.f32 %v277, %v155
    %v376 = vmul.f32 %v277, %v156
    %v377 = vmul.f32 %v278, %v155
    %v378 = vmul.f32 %v278, %v156
    %v379 = vmul.f32 %v279, %v155
    %v380 = vmul.f32 %v279, %v156
    %v381 = vmul.f32 %v280, %v155
    %v382 = vmul.f32 %v280, %v156
    %v383 = vmul.f32 %v281, %v155
    %v384 = vmul.f32 %v281, %v156
    %v385 = vmul.f32 %v282, %v155
    %v386 = vmul.f32 %v282, %v156
    %v387 = vmul.f32 %v283, %v155
    %v388 = vmul.f32 %v283, %v156
    %v389 = vmul.f32 %v284, %v155
    %v390 = vmul.f32 %v284, %v156
    %v391 = vmul.f32 %v285, %v155
    %v392 = vmul.f32 %v285, %v156
    %v393 = vmul.f32 %v286, %v155
    %v394 = vmul.f32 %v286, %v156
    %v395 = vmul.f32 %v287, %v155
    %v396 = vmul.f32 %v287, %v156
    %v397 = vmul.f32 %v288, %v155
    %v398 = vmul.f32 %v288, %v156
    %v399 = vmul.f32 %v289, %v155
    %v400 = vmul.f32 %v289, %v156
    %v401 = vmul.f32 %v290, %v155
    %v402 = vmul.f32 %v290, %v156
    %v403 = vmul.f32 %v291, %v157
    %v404 = vmul.f32 %v291, %v158
    %v405 = vmul.f32 %v292, %v157
    %v406 = vmul.f32 %v292, %v158
    %v407 = vmul.f32 %v293, %v157
    %v408 = vmul.f32 %v293, %v158
    %v409 = vmul.f32 %v294, %v157
    %v410 = vmul.f32 %v294, %v158
    %v411 = vmul.f32 %v295, %v157
    %v412 = vmul.f32 %v295, %v158
    %v413 = vmul.f32 %v296, %v157
    %v414 = vmul.f32 %v296, %v158
    %v415 = vmul.f32 %v297, %v157
    %v416 = vmul.f32 %v297, %v158
    %v417 = vmul.f32 %v298, %v157
    %v418 = vmul.f32 %v298, %v158
    %v419 = vmul.f32 %v299, %v157
    %v420 = vmul.f32 %v299, %v158
    %v421 = vmul.f32 %v300, %v157
    %v422 = vmul.f32 %v300, %v158
    %v423 = vmul.f32 %v301, %v157
    %v424 = vmul.f32 %v301, %v158
    %v425 = vmul.f32 %v302, %v157
    %v426 = vmul.f32 %v302, %v158
    %v427 = vmul.f32 %v303, %v157
    %v428 = vmul.f32 %v303, %v158
    %v429 = vmul.f32 %v304, %v157
    %v430 = vmul.f32 %v304, %v158
    %v431 = vmul.f32 %v305, %v157
    %v432 = vmul.f32 %v305, %v158
    %v433 = vmul.f32 %v306, %v157
    %v434 = vmul.f32 %v306, %v158
    %v435 = vmul.f32 %v307, %v159
    %v436 = vmul.f32 %v307, %v160
    %v437 = vmul.f32 %v308, %v159
    %v438 = vmul.f32 %v308, %v160
    %v439 = vmul.f32 %v309, %v159
    %v440 = vmul.f32 %v309, %v160
    %v441 = vmul.f32 %v310, %v159
    %v442 = vmul.f32 %v310, %v160
    %v443 = vmul.f32 %v311, %v159
    %v444 = vmul.f32 %v311, %v160
    %v445 = vmul.f32 %v312, %v159
    %v446 = vmul.f32 %v312, %v160
    %v447 = vmul.f32 %v313, %v159
    %v448 = vmul.f32 %v313, %v160
    %v449 = vmul.f32 %v314, %v159
    %v450 = vmul.f32 %v314, %v160
    %v451 = vmul.f32 %v315, %v159
    %v452 = vmul.f32 %v315, %v160
    %v453 = vmul.f32 %v316, %v159
    %v454 = vmul.f32 %v316, %v160
    %v455 = vmul.f32 %v317, %v159
    %v456 = vmul.f32 %v317, %v160
    %v457 = vmul.f32 %v318, %v159
    %v458 = vmul.f32 %v318, %v160
    %v459 = vmul.f32 %v319, %v159
    %v460 = vmul.f32 %v319, %v160
    %v461 = vmul.f32 %v320, %v159
    %v462 = vmul.f32 %v320, %v160
    %v463 = vmul.f32 %v321, %v159
    %v464 = vmul.f32 %v321, %v160
    %v465 = vmul.f32 %v322, %v159
    %v466 = vmul.f32 %v322, %v160
    %v467 = vld [vmem:[#allocation5] sm:$0xff]
    %v468 = vld [vmem:[#allocation5 + $0x8] sm:$0xff]
    %v469 = vld [vmem:[#allocation5 + $0x10] sm:$0xff]
    %v470 = vld [vmem:[#allocation5 + $0x18] sm:$0xff]
    %v471 = vld [vmem:[#allocation5 + $0x20] sm:$0xff]
    %v472 = vld [vmem:[#allocation5 + $0x28] sm:$0xff]
    %v473 = vld [vmem:[#allocation5 + $0x30] sm:$0xff]
    %v474 = vld [vmem:[#allocation5 + $0x38] sm:$0xff]
    %v475 = vld [vmem:[#allocation5 + $0x40] sm:$0xff]
    %v476 = vld [vmem:[#allocation5 + $0x48] sm:$0xff]
    %v477 = vld [vmem:[#allocation5 + $0x50] sm:$0xff]
    %v478 = vld [vmem:[#allocation5 + $0x58] sm:$0xff]
    %v479 = vld [vmem:[#allocation5 + $0x60] sm:$0xff]
    %v480 = vld [vmem:[#allocation5 + $0x68] sm:$0xff]
    %v481 = vld [vmem:[#allocation5 + $0x70] sm:$0xff]
    %v482 = vld [vmem:[#allocation5 + $0x78] sm:$0xff]
    %v483 = vld [vmem:[#allocation5 + $0x80] sm:$0xff]
    %v484 = vld [vmem:[#allocation5 + $0x88] sm:$0xff]
    %v485 = vld [vmem:[#allocation5 + $0x90] sm:$0xff]
    %v486 = vld [vmem:[#allocation5 + $0x98] sm:$0xff]
    %v487 = vld [vmem:[#allocation5 + $0xa0] sm:$0xff]
    %v488 = vld [vmem:[#allocation5 + $0xa8] sm:$0xff]
    %v489 = vld [vmem:[#allocation5 + $0xb0] sm:$0xff]
    %v490 = vld [vmem:[#allocation5 + $0xb8] sm:$0xff]
    %491 = vmatpush.msra.mxu0 %v386
    %492 = vmatpush.msra.mxu0 %v385
    %493 = vmatpush.msra.mxu0 %v384
    %494 = vmatpush.msra.mxu0 %v383
    %495 = vmatpush.msra.mxu0 %v382
    %496 = vmatpush.msra.mxu0 %v381
    %497 = vmatpush.msra.mxu0 %v380
    %498 = vmatpush.msra.mxu0 %v379
    %499 = vmatpush.msra.mxu0 %v378
    %500 = vmatpush.msra.mxu0 %v377
    %501 = vmatpush.msra.mxu0 %v376
    %502 = vmatpush.msra.mxu0 %v375
    %503 = vmatpush.msra.mxu0 %v374
    %504 = vmatpush.msra.mxu0 %v373
    %505 = vmatpush.msra.mxu0 %v372
    %506 = vmatpush.msra.mxu0 %v371
    %507 = vmatmul.f32.gmra.mxu0 %v467
    %v508 = vpop.f32.mrf.mxu0
    %v509 = vadd.f32 0.0, %v508
    %510 = vmatmul.f32.gmra.mxu0 %v473
    %v511 = vpop.f32.mrf.mxu0
    %v512 = vadd.f32 0.0, %v511
    %513 = vmatmul.f32.gmra.mxu0 %v479
    %v514 = vpop.f32.mrf.mxu0
    %v515 = vadd.f32 0.0, %v514
    %516 = vmatmul.f32.gmra.mxu0 %v485
    %v517 = vpop.f32.mrf.mxu0
    %v518 = vadd.f32 0.0, %v517
    %519 = vdwg.mxu0
    %520 = vmatpush.msra.mxu0 %v402
    %521 = vmatpush.msra.mxu0 %v401
    %522 = vmatpush.msra.mxu0 %v400
    %523 = vmatpush.msra.mxu0 %v399
    %524 = vmatpush.msra.mxu0 %v398
    %525 = vmatpush.msra.mxu0 %v397
    %526 = vmatpush.msra.mxu0 %v396
    %527 = vmatpush.msra.mxu0 %v395
    %528 = vmatpush.msra.mxu0 %v394
    %529 = vmatpush.msra.mxu0 %v393
    %530 = vmatpush.msra.mxu0 %v392
    %531 = vmatpush.msra.mxu0 %v391
    %532 = vmatpush.msra.mxu0 %v390
    %533 = vmatpush.msra.mxu0 %v389
    %534 = vmatpush.msra.mxu0 %v388
    %535 = vmatpush.msra.mxu0 %v387
    %536 = vmatmul.f32.gmra.mxu0 %v468
    %v537 = vpop.f32.mrf.mxu0
    %v538 = vadd.f32 %v509, %v537
    %539 = vmatmul.f32.gmra.mxu0 %v474
    %v540 = vpop.f32.mrf.mxu0
    %v541 = vadd.f32 %v512, %v540
    %542 = vmatmul.f32.gmra.mxu0 %v480
    %v543 = vpop.f32.mrf.mxu0
    %v544 = vadd.f32 %v515, %v543
    %545 = vmatmul.f32.gmra.mxu0 %v486
    %v546 = vpop.f32.mrf.mxu0
    %v547 = vadd.f32 %v518, %v546
    %548 = vdwg.mxu0
    %549 = vmatpush.msra.mxu0 %v418
    %550 = vmatpush.msra.mxu0 %v417
    %551 = vmatpush.msra.mxu0 %v416
    %552 = vmatpush.msra.mxu0 %v415
    %553 = vmatpush.msra.mxu0 %v414
    %554 = vmatpush.msra.mxu0 %v413
    %555 = vmatpush.msra.mxu0 %v412
    %556 = vmatpush.msra.mxu0 %v411
    %557 = vmatpush.msra.mxu0 %v410
    %558 = vmatpush.msra.mxu0 %v409
    %559 = vmatpush.msra.mxu0 %v408
    %560 = vmatpush.msra.mxu0 %v407
    %561 = vmatpush.msra.mxu0 %v406
    %562 = vmatpush.msra.mxu0 %v405
    %563 = vmatpush.msra.mxu0 %v404
    %564 = vmatpush.msra.mxu0 %v403
    %565 = vmatmul.f32.gmra.mxu0 %v469
    %v566 = vpop.f32.mrf.mxu0
    %v567 = vadd.f32 %v538, %v566
    %568 = vmatmul.f32.gmra.mxu0 %v475
    %v569 = vpop.f32.mrf.mxu0
    %v570 = vadd.f32 %v541, %v569
    %571 = vmatmul.f32.gmra.mxu0 %v481
    %v572 = vpop.f32.mrf.mxu0
    %v573 = vadd.f32 %v544, %v572
    %574 = vmatmul.f32.gmra.mxu0 %v487
    %v575 = vpop.f32.mrf.mxu0
    %v576 = vadd.f32 %v547, %v575
    %577 = vdwg.mxu0
    %578 = vmatpush.msra.mxu0 %v434
    %579 = vmatpush.msra.mxu0 %v433
    %580 = vmatpush.msra.mxu0 %v432
    %581 = vmatpush.msra.mxu0 %v431
    %582 = vmatpush.msra.mxu0 %v430
    %583 = vmatpush.msra.mxu0 %v429
    %584 = vmatpush.msra.mxu0 %v428
    %585 = vmatpush.msra.mxu0 %v427
    %586 = vmatpush.msra.mxu0 %v426
    %587 = vmatpush.msra.mxu0 %v425
    %588 = vmatpush.msra.mxu0 %v424
    %589 = vmatpush.msra.mxu0 %v423
    %590 = vmatpush.msra.mxu0 %v422
    %591 = vmatpush.msra.mxu0 %v421
    %592 = vmatpush.msra.mxu0 %v420
    %593 = vmatpush.msra.mxu0 %v419
    %594 = vmatmul.f32.gmra.mxu0 %v470
    %v595 = vpop.f32.mrf.mxu0
    %v596 = vadd.f32 %v567, %v595
    %597 = vmatmul.f32.gmra.mxu0 %v476
    %v598 = vpop.f32.mrf.mxu0
    %v599 = vadd.f32 %v570, %v598
    %600 = vmatmul.f32.gmra.mxu0 %v482
    %v601 = vpop.f32.mrf.mxu0
    %v602 = vadd.f32 %v573, %v601
    %603 = vmatmul.f32.gmra.mxu0 %v488
    %v604 = vpop.f32.mrf.mxu0
    %v605 = vadd.f32 %v576, %v604
    %606 = vdwg.mxu0
    %607 = vmatpush.msra.mxu0 %v450
    %608 = vmatpush.msra.mxu0 %v449
    %609 = vmatpush.msra.mxu0 %v448
    %610 = vmatpush.msra.mxu0 %v447
    %611 = vmatpush.msra.mxu0 %v446
    %612 = vmatpush.msra.mxu0 %v445
    %613 = vmatpush.msra.mxu0 %v444
    %614 = vmatpush.msra.mxu0 %v443
    %615 = vmatpush.msra.mxu0 %v442
    %616 = vmatpush.msra.mxu0 %v441
    %617 = vmatpush.msra.mxu0 %v440
    %618 = vmatpush.msra.mxu0 %v439
    %619 = vmatpush.msra.mxu0 %v438
    %620 = vmatpush.msra.mxu0 %v437
    %621 = vmatpush.msra.mxu0 %v436
    %622 = vmatpush.msra.mxu0 %v435
    %623 = vmatmul.f32.gmra.mxu0 %v471
    %v624 = vpop.f32.mrf.mxu0
    %v625 = vadd.f32 %v596, %v624
    %626 = vmatmul.f32.gmra.mxu0 %v477
    %v627 = vpop.f32.mrf.mxu0
    %v628 = vadd.f32 %v599, %v627
    %629 = vmatmul.f32.gmra.mxu0 %v483
    %v630 = vpop.f32.mrf.mxu0
    %v631 = vadd.f32 %v602, %v630
    %632 = vmatmul.f32.gmra.mxu0 %v489
    %v633 = vpop.f32.mrf.mxu0
    %v634 = vadd.f32 %v605, %v633
    %635 = vdwg.mxu0
    %636 = vmatpush.msra.mxu0 %v466
    %637 = vmatpush.msra.mxu0 %v465
    %638 = vmatpush.msra.mxu0 %v464
    %639 = vmatpush.msra.mxu0 %v463
    %640 = vmatpush.msra.mxu0 %v462
    %641 = vmatpush.msra.mxu0 %v461
    %642 = vmatpush.msra.mxu0 %v460
    %643 = vmatpush.msra.mxu0 %v459
    %644 = vmatpush.msra.mxu0 %v458
    %645 = vmatpush.msra.mxu0 %v457
    %646 = vmatpush.msra.mxu0 %v456
    %647 = vmatpush.msra.mxu0 %v455
    %648 = vmatpush.msra.mxu0 %v454
    %649 = vmatpush.msra.mxu0 %v453
    %650 = vmatpush.msra.mxu0 %v452
    %651 = vmatpush.msra.mxu0 %v451
    %652 = vmatmul.f32.gmra.mxu0 %v472
    %v653 = vpop.f32.mrf.mxu0
    %v654 = vadd.f32 %v625, %v653
    %655 = vmatmul.f32.gmra.mxu0 %v478
    %v656 = vpop.f32.mrf.mxu0
    %v657 = vadd.f32 %v628, %v656
    %658 = vmatmul.f32.gmra.mxu0 %v484
    %v659 = vpop.f32.mrf.mxu0
    %v660 = vadd.f32 %v631, %v659
    %661 = vmatmul.f32.gmra.mxu0 %v490
    %v662 = vpop.f32.mrf.mxu0
    %v663 = vadd.f32 %v634, %v662
    %664 = vdwg.mxu0
    %665 = vst [vmem:[#allocation7] sm:$0xff] %v654
    %666 = vst [vmem:[#allocation7 + $0x8] sm:$0xff] %v657
    %667 = vst [vmem:[#allocation7 + $0x10] sm:$0xff] %v660
    %668 = vst [vmem:[#allocation7 + $0x18] sm:$0xff] %v663
    // Predicated region
    $region18: #{tpu_custom_call.1} parent=1 // pred_check
      _
    $region19: #{tpu_custom_call.1} parent=1 // pred_check_branch
      %670 = sbr.rel (0) target = $region21
    $region20: #{tpu_custom_call.1} parent=1 // pred_region
      %672 = vsyncadd [#allocation4], 0
      %s673 = sshll.u32 [#allocation7], 4
      %s674 = int_to_ptr.vmem [resolvable:$true] %s673
      %s675 = sshll.u32 %s2, 4
      %s676 = int_to_ptr.hbm [resolvable:$true] %s675
      %681 = dma.vmem_to_hbm [thread:$0]  %s674, 512, %s676, [#allocation4], 128, 128, 8
    $region21: #{tpu_custom_call.1} parent=1 // pred_fallthru
      _
    // Predicated region
    $region22: #{tpu_custom_call.1} parent=1 // pred_check
      _
    $region23: #{tpu_custom_call.1} parent=1 // pred_check_branch
      %683 = sbr.rel (0) target = $region25
    $region24: #{tpu_custom_call.1} parent=1 // pred_region
      %685 = dma.done [#allocation4], 512
    $region25: #{tpu_custom_call.1} parent=1 // pred_fallthru
      _
    %686 = vsyncpa [#allocation3], 1
    %687 = vsyncpa [#allocation6], 1
    %688 = vsyncpa [#allocation4], 1

</llo_original>
